<compile_context>
chip_gen: v7x
topology: tpu7x:2x2x1
jax: 0.10.0
libtpu: 0.0.40
codegen_flags: <defaults>
</compile_context>

<pallas_src>
import functools

import jax
import jax.numpy as jnp
from jax.experimental import pallas as pl
from jax.experimental.pallas import tpu as pltpu


def _use_bf16_activations():
    """bf16 tanh only where the EUP/VPU have a bf16 path (v6e / v7x)."""
    try:
        kind = jax.devices()[0].device_kind.lower()
    except Exception:  # pragma: no cover - defensive
        return False
    return ("v6" in kind) or ("v7" in kind) or ("7x" in kind)


def _select_tile(batch, tile_b):
    """Pick the batch tile (lane) size and number of grid tiles."""
    if batch <= 256:
        # Tiny batch: one full-extent tile (full-extent blocks are exempt from
        # the (8,128) divisibility constraint).
        return batch, 1
    assert tile_b % 128 == 0, "tile_b must be a multiple of 128"
    # At least 2 tiles (v7x megacore), 128-aligned, capped at tile_b.
    half = -(-batch // 2)
    half_aligned = -(-half // 128) * 128
    tb = min(tile_b, half_aligned)
    num_tiles = -(-batch // tb)
    return tb, num_tiles


def _residual_net_kernel(x_ref, w1_ref, w2_ref, b2_ref, w3_ref, b3_ref,
                         out_ref, *, bf16_act):
    # x_ref:  (16, tile_b)   bf16  -- rows [0:in_f]=x^T, row in_f = ones (bias),
    #                                  remaining rows zero; batch on lanes.
    # w1_ref: (hid, 16)      bf16  -- columns [0:in_f]=w1, col in_f = b1, rest 0.
    # w2_ref: (hid, hid)     bf16,  b2_ref: (hid, 1)   f32
    # w3_ref: (out_f, hid)   bf16,  b3_ref: (out_f, 1) f32
    # out_ref: (1, tile_b)   f32   -- lane-dense store.
    act_dtype = jnp.bfloat16 if bf16_act else jnp.float32

    # fc1 on the MXU; b1 is already folded in via the ones-row / bias-column.
    h1_pre = jnp.dot(w1_ref[...], x_ref[...],
                     preferred_element_type=jnp.float32)          # (hid, tb) f32
    h1 = jnp.tanh(h1_pre.astype(act_dtype)).astype(jnp.bfloat16)  # (hid, tb) bf16

    # fc2 on the MXU: bf16 x bf16 -> f32 accumulate, then f32 bias broadcast.
    h2_pre = (jnp.dot(w2_ref[...], h1, preferred_element_type=jnp.float32)
              + b2_ref[...])
    h2 = jnp.tanh(h2_pre.astype(act_dtype)).astype(jnp.bfloat16)  # (hid, tb) bf16

    # fc3 on the MXU.
    r = (jnp.dot(w3_ref[...], h2, preferred_element_type=jnp.float32)
         + b3_ref[...])                                           # (out_f, tb) f32

    # 0.5 * ||r||^2 per column -> lane-dense (1, tb) row.
    out_ref[...] = 0.5 * jnp.sum(r * r, axis=0, keepdims=True)


@functools.partial(jax.jit, static_argnames=("tile_b",))
def residual_net_forward(x, w1, b1, w2, b2, w3, b3, *, tile_b=4096):
    """x: (B, in_features) f32 -> (B, 1) f32.

    Weights in PyTorch layout: w = (out_dim, in_dim), b = (out_dim, 1).
    """
    B, in_f = x.shape
    hid = w1.shape[0]
    out_f = w3.shape[0]
    pad_in = 16  # bf16 sublane-friendly contraction dim for fc1 on the MXU
    assert in_f + 1 <= pad_in

    tb, num_tiles = _select_tile(B, tile_b)
    b_pad = num_tiles * tb

    # Fold b1 into w1: padded (hid, 16) bf16 weight whose column `in_f` is b1.
    w1p = jnp.zeros((hid, pad_in), jnp.bfloat16)
    w1p = w1p.at[:, :in_f].set(w1.astype(jnp.bfloat16))
    w1p = w1p.at[:, in_f].set(b1[:, 0].astype(jnp.bfloat16))

    # One fused prep of x: transpose (batch on lanes), bf16 cast, ones-row for
    # the folded bias, zero pad to (pad_in, b_pad).
    x_prep = jnp.zeros((pad_in, b_pad), jnp.bfloat16)
    x_prep = x_prep.at[:in_f, :B].set(x.T.astype(jnp.bfloat16))
    x_prep = x_prep.at[in_f, :].set(1.0)

    # One-time bf16 cast of the MXU-layer weights.
    w2b = w2.astype(jnp.bfloat16)
    w3b = w3.astype(jnp.bfloat16)

    bf16_act = _use_bf16_activations()

    out_row = pl.pallas_call(
        functools.partial(_residual_net_kernel, bf16_act=bf16_act),
        out_shape=jax.ShapeDtypeStruct((1, b_pad), jnp.float32),
        grid_spec=pltpu.PrefetchScalarGridSpec(
            num_scalar_prefetch=0,
            grid=(num_tiles,),
            in_specs=[
                # batch tile of the prepared (transposed) input
                pl.BlockSpec((pad_in, tb), lambda i: (0, i)),
                # weights / biases: full arrays, constant index_map so they stay
                # resident across grid steps (no per-step re-DMA).
                pl.BlockSpec((hid, pad_in), lambda i: (0, 0)),
                pl.BlockSpec((hid, hid), lambda i: (0, 0)),
                pl.BlockSpec((hid, 1), lambda i: (0, 0)),
                pl.BlockSpec((out_f, hid), lambda i: (0, 0)),
                pl.BlockSpec((out_f, 1), lambda i: (0, 0)),
            ],
            out_specs=pl.BlockSpec((1, tb), lambda i: (0, i)),
        ),
        compiler_params=pltpu.CompilerParams(
            dimension_semantics=("parallel",),
            # Explicit limit so the larger batch tile never hits the default
            # scoped-VMEM cap (16 MiB on v5e); well under physical VMEM on all
            # of v5e / v6e / v7x.
            vmem_limit_bytes=32 * 1024 * 1024,
        ),
    )(x_prep, w1p, w2b, b2, w3b, b3)

    return out_row[0, :B].reshape(B, 1)


def _kaiming_uniform(key, fan_in, shape):
    # matches nn.init.kaiming_uniform_ default (a=0 -> bound = sqrt(6/fan_in))
    bound = jnp.sqrt(6.0 / fan_in)
    return jax.random.uniform(key, shape, jnp.float32, -bound, bound)


def init_params(key, in_features=3, out_features=3, n_hidden=128):
    k1, k2, k3 = jax.random.split(key, 3)
    # PyTorch layout: (out_dim, in_dim); biases as (out_dim, 1) columns.
    w1 = _kaiming_uniform(k1, in_features, (n_hidden, in_features))
    w2 = _kaiming_uniform(k2, n_hidden, (n_hidden, n_hidden))
    w3 = _kaiming_uniform(k3, n_hidden, (out_features, n_hidden))
    b1 = jnp.zeros((n_hidden, 1), jnp.float32)
    b2 = jnp.zeros((n_hidden, 1), jnp.float32)
    b3 = jnp.zeros((out_features, 1), jnp.float32)
    return w1, b1, w2, b2, w3, b3


def _reference_forward(x, w1, b1, w2, b2, w3, b3):
    h1 = jnp.tanh(x @ w1.T + b1[:, 0])
    h2 = jnp.tanh(h1 @ w2.T + b2[:, 0])
    r = h2 @ w3.T + b3[:, 0]
    return 0.5 * jnp.sum(r * r, axis=1, keepdims=True)


if __name__ == "__main__":
    key = jax.random.PRNGKey(0)
    kx1, kx2, kp, kb1, kb2, kb3 = jax.random.split(key, 6)

    in_features, out_features, n_hidden = 3, 3, 128
    w1, b1, w2, b2, w3, b3 = init_params(kp, in_features, out_features, n_hidden)
    # The module initializes biases to zero; perturb them here so the folded-b1
    # path and the b2/b3 broadcast adds are actually exercised by the check.
    b1 = 0.1 * jax.random.normal(kb1, b1.shape, jnp.float32)
    b2 = 0.1 * jax.random.normal(kb2, b2.shape, jnp.float32)
    b3 = 0.1 * jax.random.normal(kb3, b3.shape, jnp.float32)
    params = (w1, b1, w2, b2, w3, b3)

    # Small batch: single full-extent tile, grid=(1,).
    x_small = jax.random.normal(kx1, (8, in_features), dtype=jnp.float32)
    out_small = jax.block_until_ready(residual_net_forward(x_small, *params))
    ref_small = _reference_forward(x_small, *params)
    assert out_small.shape == (8, 1)
    assert jnp.allclose(out_small, ref_small, rtol=1e-1, atol=2e-2)

    # Larger non-multiple batch: exercises 128-aligned batch tiling (>=2 tiles),
    # lane zero-padding and the pad-column discard, grid=(2,).
    x_big = jax.random.normal(kx2, (300, in_features), dtype=jnp.float32)
    out_big = jax.block_until_ready(residual_net_forward(x_big, *params))
    ref_big = _reference_forward(x_big, *params)
    assert out_big.shape == (300, 1)
    assert jnp.allclose(out_big, ref_big, rtol=1e-1, atol=2e-2)

    print("KERNEL_OK")
</pallas_src>

<mosaic_0001>
module attributes {stable_mosaic.version = 11 : i64} {
  func.func @_residual_net_kernel(%arg0: i32, %arg1: memref<16x8xbf16, #tpu.memory_space<vmem>>, %arg2: memref<128x16xbf16, #tpu.memory_space<vmem>>, %arg3: memref<128x128xbf16, #tpu.memory_space<vmem>>, %arg4: memref<128x1xf32, #tpu.memory_space<vmem>>, %arg5: memref<3x128xbf16, #tpu.memory_space<vmem>>, %arg6: memref<3x1xf32, #tpu.memory_space<vmem>>, %arg7: memref<1x8xf32, #tpu.memory_space<vmem>>) attributes {dimension_semantics = [#tpu.dimension_semantics<parallel>], iteration_bounds = array<i64: 1>, scalar_prefetch = 0 : i64, scratch_operands = 0 : i64, tpu.core_type = #tpu.core_type<tc>, window_params = [{transform_indices = @transform_0, window_bounds = array<i64: 16, 8>}, {pipeline_mode = #tpu.pipeline_mode<synchronous>, transform_indices = @transform_1, window_bounds = array<i64: 128, 16>}, {pipeline_mode = #tpu.pipeline_mode<synchronous>, transform_indices = @transform_2, window_bounds = array<i64: 128, 128>}, {pipeline_mode = #tpu.pipeline_mode<synchronous>, transform_indices = @transform_3, window_bounds = array<i64: 128, 1>}, {pipeline_mode = #tpu.pipeline_mode<synchronous>, transform_indices = @transform_4, window_bounds = array<i64: 3, 128>}, {pipeline_mode = #tpu.pipeline_mode<synchronous>, transform_indices = @transform_5, window_bounds = array<i64: 3, 1>}, {transform_indices = @transform_6, window_bounds = array<i64: 1, 8>}]} {
    %c0 = arith.constant 0 : index
    %c0_0 = arith.constant 0 : index
    %0 = vector.load %arg2[%c0, %c0_0] : memref<128x16xbf16, #tpu.memory_space<vmem>>, vector<128x16xbf16>
    %c0_1 = arith.constant 0 : index
    %c0_2 = arith.constant 0 : index
    %1 = vector.load %arg1[%c0_1, %c0_2] : memref<16x8xbf16, #tpu.memory_space<vmem>>, vector<16x8xbf16>
    %cst = arith.constant dense<0.000000e+00> : vector<128x8xf32>
    %2 = tpu.matmul %0, %1, %cst {dimension_numbers = #tpu.dot_dimension_numbers<[1], [0], [0], [1], [0, 0, 1, 1], [], []>} : vector<128x16xbf16>, vector<16x8xbf16>, vector<128x8xf32> -> vector<128x8xf32>
    %3 = math.tanh %2 : vector<128x8xf32>
    %4 = arith.truncf %3 : vector<128x8xf32> to vector<128x8xbf16>
    %c0_3 = arith.constant 0 : index
    %c0_4 = arith.constant 0 : index
    %5 = vector.load %arg3[%c0_3, %c0_4] : memref<128x128xbf16, #tpu.memory_space<vmem>>, vector<128x128xbf16>
    %cst_5 = arith.constant dense<0.000000e+00> : vector<128x8xf32>
    %6 = tpu.matmul %5, %4, %cst_5 {dimension_numbers = #tpu.dot_dimension_numbers<[1], [0], [0], [1], [0, 0, 1, 1], [], []>} : vector<128x128xbf16>, vector<128x8xbf16>, vector<128x8xf32> -> vector<128x8xf32>
    %c0_6 = arith.constant 0 : index
    %c0_7 = arith.constant 0 : index
    %7 = vector.load %arg4[%c0_6, %c0_7] : memref<128x1xf32, #tpu.memory_space<vmem>>, vector<128x1xf32>
    %8 = vector.broadcast %7 : vector<128x1xf32> to vector<128x8xf32>
    %9 = arith.addf %6, %8 : vector<128x8xf32>
    %10 = math.tanh %9 : vector<128x8xf32>
    %11 = arith.truncf %10 : vector<128x8xf32> to vector<128x8xbf16>
    %c0_8 = arith.constant 0 : index
    %c0_9 = arith.constant 0 : index
    %12 = vector.load %arg5[%c0_8, %c0_9] : memref<3x128xbf16, #tpu.memory_space<vmem>>, vector<3x128xbf16>
    %cst_10 = arith.constant dense<0.000000e+00> : vector<3x8xf32>
    %13 = tpu.matmul %12, %11, %cst_10 {dimension_numbers = #tpu.dot_dimension_numbers<[1], [0], [0], [1], [0, 0, 1, 1], [], []>} : vector<3x128xbf16>, vector<128x8xbf16>, vector<3x8xf32> -> vector<3x8xf32>
    %c0_11 = arith.constant 0 : index
    %c0_12 = arith.constant 0 : index
    %14 = vector.load %arg6[%c0_11, %c0_12] : memref<3x1xf32, #tpu.memory_space<vmem>>, vector<3x1xf32>
    %15 = vector.broadcast %14 : vector<3x1xf32> to vector<3x8xf32>
    %16 = arith.addf %13, %15 : vector<3x8xf32>
    %17 = arith.mulf %16, %16 : vector<3x8xf32>
    %cst_13 = arith.constant dense<0.000000e+00> : vector<8xf32>
    %18 = vector.multi_reduction <add>, %17, %cst_13 [0] : vector<3x8xf32> to vector<8xf32>
    %19 = vector.shape_cast %18 : vector<8xf32> to vector<1x8xf32>
    %cst_14 = arith.constant 5.000000e-01 : f32
    %20 = vector.broadcast %cst_14 : f32 to vector<1x8xf32>
    %21 = arith.mulf %20, %19 : vector<1x8xf32>
    %c0_15 = arith.constant 0 : index
    %c0_16 = arith.constant 0 : index
    %22 = vector.load %arg7[%c0_15, %c0_16] : memref<1x8xf32, #tpu.memory_space<vmem>>, vector<1x8xf32>
    tpu.vector_store %arg7[%c0_15, %c0_16], %21 {strides = array<i32>} : memref<1x8xf32, #tpu.memory_space<vmem>>, vector<1x8xf32>,
    return
  }
  func.func @transform_0(%arg0: i32) -> (i32, i32) {
    %c0_i32 = arith.constant 0 : i32
    %c0_i32_0 = arith.constant 0 : i32
    return %c0_i32, %arg0 : i32, i32
  }
  func.func @transform_1(%arg0: i32) -> (i32, i32) {
    %c0_i32 = arith.constant 0 : i32
    %c0_i32_0 = arith.constant 0 : i32
    %c0_i32_1 = arith.constant 0 : i32
    return %c0_i32, %c0_i32_0 : i32, i32
  }
  func.func @transform_2(%arg0: i32) -> (i32, i32) {
    %c0_i32 = arith.constant 0 : i32
    %c0_i32_0 = arith.constant 0 : i32
    %c0_i32_1 = arith.constant 0 : i32
    return %c0_i32, %c0_i32_0 : i32, i32
  }
  func.func @transform_3(%arg0: i32) -> (i32, i32) {
    %c0_i32 = arith.constant 0 : i32
    %c0_i32_0 = arith.constant 0 : i32
    %c0_i32_1 = arith.constant 0 : i32
    return %c0_i32, %c0_i32_0 : i32, i32
  }
  func.func @transform_4(%arg0: i32) -> (i32, i32) {
    %c0_i32 = arith.constant 0 : i32
    %c0_i32_0 = arith.constant 0 : i32
    %c0_i32_1 = arith.constant 0 : i32
    return %c0_i32, %c0_i32_0 : i32, i32
  }
  func.func @transform_5(%arg0: i32) -> (i32, i32) {
    %c0_i32 = arith.constant 0 : i32
    %c0_i32_0 = arith.constant 0 : i32
    %c0_i32_1 = arith.constant 0 : i32
    return %c0_i32, %c0_i32_0 : i32, i32
  }
  func.func @transform_6(%arg0: i32) -> (i32, i32) {
    %c0_i32 = arith.constant 0 : i32
    %c0_i32_0 = arith.constant 0 : i32
    return %c0_i32, %arg0 : i32, i32
  }
}

</mosaic_0001>

<llo_original>
// kernel: residual_net_forward.1
$region0: #{residual_net_forward.1}
  #allocation0 [shape = 'u32[]', space=smem, size = 0x4, offset = 0x4, fixed_abs, tag = 'smem constant byte address 0x4 - core index']
  #allocation1 [shape = 'u32[144,128]{1,0:T(1,128)}', space=vmem, size = 0x12000, scoped, tag = 'internal scratch']
  %s0 = inlined_call_operand.vmem [shape: bf16[16,8], index: 0, kind: input, shape index: {}]
  %s1 = inlined_call_operand.vmem [shape: bf16[128,16], index: 1, kind: input, shape index: {}]
  %s2 = inlined_call_operand.vmem [shape: bf16[128,128], index: 2, kind: input, shape index: {}]
  %s3 = inlined_call_operand.vmem [shape: f32[128,1], index: 3, kind: input, shape index: {}]
  %s4 = inlined_call_operand.vmem [shape: bf16[3,128], index: 4, kind: input, shape index: {}]
  %s5 = inlined_call_operand.vmem [shape: f32[3,1], index: 5, kind: input, shape index: {}]
  %s6 = inlined_call_operand.hbm [shape: f32[1,8], index: 6, kind: output, shape index: {}]
  %s7 = sld [smem:[#allocation0]]
  $region34: #{residual_net_forward.1} parent=0
    _
  %s9 = ssub.s32 1, %s7
  %s10 = scalar_select 0, %s9, %s7
  $region1: #{residual_net_forward.1} parent=0
    #allocation2 [shape = 'u8[512]{0}', space=vmem, size = 0x400, scoped, tag = 'output window, operand 0, single buffered']
    #allocation3 [shape = 's32[1]{0}', space=sflag, size = 0x4, scoped, tag = 'scoped memory for residual_net_forward.1']
    %11 = vsyncpa [#allocation3], 0
    // Predicated region
    $region2: #{residual_net_forward.1} parent=1 // pred_check
      _
    $region3: #{residual_net_forward.1} parent=1 // pred_check_branch
      %13 = sbr.rel (0) target = $region5
    $region4: #{residual_net_forward.1} parent=1 // pred_region
      _
    $region5: #{residual_net_forward.1} parent=1 // pred_fallthru
      _
    // Predicated region
    $region6: #{residual_net_forward.1} parent=1 // pred_check
      _
    $region7: #{residual_net_forward.1} parent=1 // pred_check_branch
      %15 = sbr.rel (0) target = $region9
    $region8: #{residual_net_forward.1} parent=1 // pred_region
      _
    $region9: #{residual_net_forward.1} parent=1 // pred_fallthru
      _
    // Predicated region
    $region10: #{residual_net_forward.1} parent=1 // pred_check
      _
    $region11: #{residual_net_forward.1} parent=1 // pred_check_branch
      %17 = sbr.rel (0) target = $region13
    $region12: #{residual_net_forward.1} parent=1 // pred_region
      _
    $region13: #{residual_net_forward.1} parent=1 // pred_fallthru
      _
    // Predicated region
    $region14: #{residual_net_forward.1} parent=1 // pred_check
      _
    $region15: #{residual_net_forward.1} parent=1 // pred_check_branch
      %19 = sbr.rel (0) target = $region17
    $region16: #{residual_net_forward.1} parent=1 // pred_region
      _
    $region17: #{residual_net_forward.1} parent=1 // pred_fallthru
      _
    // Predicated region
    $region18: #{residual_net_forward.1} parent=1 // pred_check
      _
    $region19: #{residual_net_forward.1} parent=1 // pred_check_branch
      %21 = sbr.rel (0) target = $region21
    $region20: #{residual_net_forward.1} parent=1 // pred_region
      _
    $region21: #{residual_net_forward.1} parent=1 // pred_fallthru
      _
    // Predicated region
    $region22: #{residual_net_forward.1} parent=1 // pred_check
      _
    $region23: #{residual_net_forward.1} parent=1 // pred_check_branch
      %23 = sbr.rel (0) target = $region25
    $region24: #{residual_net_forward.1} parent=1 // pred_region
      _
    $region25: #{residual_net_forward.1} parent=1 // pred_fallthru
      _
    %v25 = vld [vmem:[%s1] sm:$0xf]
    %v26 = vld [vmem:[%s1 + $0x4] sm:$0xf]
    %v27 = vld [vmem:[%s1 + $0x8] sm:$0xf]
    %v28 = vld [vmem:[%s1 + $0xc] sm:$0xf]
    %v29 = vld [vmem:[%s1 + $0x10] sm:$0xf]
    %v30 = vld [vmem:[%s1 + $0x14] sm:$0xf]
    %v31 = vld [vmem:[%s1 + $0x18] sm:$0xf]
    %v32 = vld [vmem:[%s1 + $0x1c] sm:$0xf]
    %v33 = vld [vmem:[%s1 + $0x20] sm:$0xf]
    %v34 = vld [vmem:[%s1 + $0x24] sm:$0xf]
    %v35 = vld [vmem:[%s1 + $0x28] sm:$0xf]
    %v36 = vld [vmem:[%s1 + $0x2c] sm:$0xf]
    %v37 = vld [vmem:[%s1 + $0x30] sm:$0xf]
    %v38 = vld [vmem:[%s1 + $0x34] sm:$0xf]
    %v39 = vld [vmem:[%s1 + $0x38] sm:$0xf]
    %v40 = vld [vmem:[%s1 + $0x3c] sm:$0xf]
    %v41 = vld [vmem:[%s0] sm:$0xf]
    %v42 = vld [vmem:[%s0 + $0x4] sm:$0xf]
    %v59 = vunpack.c.l.b16 %v25
    %v60 = vunpack.c.l.b16 %v26
    %v61 = vunpack.c.l.b16 %v27
    %v62 = vunpack.c.l.b16 %v28
    %v63 = vunpack.c.l.b16 %v29
    %v64 = vunpack.c.l.b16 %v30
    %v65 = vunpack.c.l.b16 %v31
    %v66 = vunpack.c.l.b16 %v32
    %v67 = vunpack.c.l.b16 %v33
    %v68 = vunpack.c.l.b16 %v34
    %v69 = vunpack.c.l.b16 %v35
    %v70 = vunpack.c.l.b16 %v36
    %v71 = vunpack.c.l.b16 %v37
    %v72 = vunpack.c.l.b16 %v38
    %v73 = vunpack.c.l.b16 %v39
    %v74 = vunpack.c.l.b16 %v40
    %v75 = vpack.c.b16 %v60, %v59
    %v76 = vpack.c.b16 %v62, %v61
    %v77 = vpack.c.b16 %v64, %v63
    %v78 = vpack.c.b16 %v66, %v65
    %v79 = vpack.c.b16 %v68, %v67
    %v80 = vpack.c.b16 %v70, %v69
    %v81 = vpack.c.b16 %v72, %v71
    %v82 = vpack.c.b16 %v74, %v73
    %v85 = vunpack.c.l.b16 %v41
    %v86 = vunpack.c.l.b16 %v42
    %v87 = vpack.c.b16 %v86, %v85
    %vm89 = vcmask 130048
    %v91 = vsel %vm89, %v75, 0
    %v94 = vsel %vm89, %v76, 0
    %v97 = vsel %vm89, %v77, 0
    %v100 = vsel %vm89, %v78, 0
    %v103 = vsel %vm89, %v79, 0
    %v106 = vsel %vm89, %v80, 0
    %v109 = vsel %vm89, %v81, 0
    %v112 = vsel %vm89, %v82, 0
    %114 = vmatprep.subr.bf16.mxu0 0
    %115 = vmatpush1.bf16.msra.mxu0 %v87
    %116 = vmatprep.subr.bf16.mxu0 0
    %117 = vmatpush1.bf16.msra.mxu0 0
    %118 = vmatprep.subr.bf16.mxu0 0
    %119 = vmatpush1.bf16.msra.mxu0 0
    %120 = vmatprep.subr.bf16.mxu0 0
    %121 = vmatpush1.bf16.msra.mxu0 0
    %122 = vmatprep.subr.bf16.mxu0 0
    %123 = vmatpush1.bf16.msra.mxu0 0
    %124 = vmatprep.subr.bf16.mxu0 0
    %125 = vmatpush1.bf16.msra.mxu0 0
    %126 = vmatprep.subr.bf16.mxu0 0
    %127 = vmatpush1.bf16.msra.mxu0 0
    %128 = vmatprep.subr.bf16.mxu0 0
    %129 = vmatpush1.bf16.msra.mxu0 0
    %130 = vmatprep.subr.bf16.mxu0 0
    %131 = vmatpush1.bf16.msra.mxu0 0
    %132 = vmatprep.subr.bf16.mxu0 0
    %133 = vmatpush1.bf16.msra.mxu0 0
    %134 = vmatprep.subr.bf16.mxu0 0
    %135 = vmatpush1.bf16.msra.mxu0 0
    %136 = vmatprep.subr.bf16.mxu0 0
    %137 = vmatpush1.bf16.msra.mxu0 0
    %138 = vmatprep.subr.bf16.mxu0 0
    %139 = vmatpush1.bf16.msra.mxu0 0
    %140 = vmatprep.subr.bf16.mxu0 0
    %141 = vmatpush1.bf16.msra.mxu0 0
    %142 = vmatprep.subr.bf16.mxu0 0
    %143 = vmatpush1.bf16.msra.mxu0 0
    %144 = vmatprep.subr.bf16.mxu0 0
    %145 = vmatpush1.bf16.msra.mxu0 0
    %146 = vmatprep.mubr.bf16.mxu0 0
    %147 = vmatmul.mubr.bf16.gmra.mrb[0].mxu0 %v91
    %v148 = vpop.f32.mrb[0].mxu0
    %v149 = vadd.f32 0.0, %v148
    %v150 = vpop.f32.mrb[0].mxu0
    %v151 = vpop.f32.mrb[0].mxu0
    %v152 = vadd.f32 0.0, %v151
    %v153 = vpop.f32.mrb[0].mxu0
    %154 = vmatprep.mubr.bf16.mxu0 0
    %155 = vmatmul.mubr.bf16.gmra.mrb[0].mxu0 %v94
    %v156 = vpop.f32.mrb[0].mxu0
    %v157 = vadd.f32 0.0, %v156
    %v158 = vpop.f32.mrb[0].mxu0
    %v159 = vpop.f32.mrb[0].mxu0
    %v160 = vadd.f32 0.0, %v159
    %v161 = vpop.f32.mrb[0].mxu0
    %162 = vmatprep.mubr.bf16.mxu0 0
    %163 = vmatmul.mubr.bf16.gmra.mrb[0].mxu0 %v97
    %v164 = vpop.f32.mrb[0].mxu0
    %v165 = vadd.f32 0.0, %v164
    %v166 = vpop.f32.mrb[0].mxu0
    %v167 = vpop.f32.mrb[0].mxu0
    %v168 = vadd.f32 0.0, %v167
    %v169 = vpop.f32.mrb[0].mxu0
    %170 = vmatprep.mubr.bf16.mxu0 0
    %171 = vmatmul.mubr.bf16.gmra.mrb[0].mxu0 %v100
    %v172 = vpop.f32.mrb[0].mxu0
    %v173 = vadd.f32 0.0, %v172
    %v174 = vpop.f32.mrb[0].mxu0
    %v175 = vpop.f32.mrb[0].mxu0
    %v176 = vadd.f32 0.0, %v175
    %v177 = vpop.f32.mrb[0].mxu0
    %178 = vmatprep.mubr.bf16.mxu0 0
    %179 = vmatmul.mubr.bf16.gmra.mrb[0].mxu0 %v103
    %v180 = vpop.f32.mrb[0].mxu0
    %v181 = vadd.f32 0.0, %v180
    %v182 = vpop.f32.mrb[0].mxu0
    %v183 = vpop.f32.mrb[0].mxu0
    %v184 = vadd.f32 0.0, %v183
    %v185 = vpop.f32.mrb[0].mxu0
    %186 = vmatprep.mubr.bf16.mxu0 0
    %187 = vmatmul.mubr.bf16.gmra.mrb[0].mxu0 %v106
    %v188 = vpop.f32.mrb[0].mxu0
    %v189 = vadd.f32 0.0, %v188
    %v190 = vpop.f32.mrb[0].mxu0
    %v191 = vpop.f32.mrb[0].mxu0
    %v192 = vadd.f32 0.0, %v191
    %v193 = vpop.f32.mrb[0].mxu0
    %194 = vmatprep.mubr.bf16.mxu0 0
    %195 = vmatmul.mubr.bf16.gmra.mrb[0].mxu0 %v109
    %v196 = vpop.f32.mrb[0].mxu0
    %v197 = vadd.f32 0.0, %v196
    %v198 = vpop.f32.mrb[0].mxu0
    %v199 = vpop.f32.mrb[0].mxu0
    %v200 = vadd.f32 0.0, %v199
    %v201 = vpop.f32.mrb[0].mxu0
    %202 = vmatprep.mubr.bf16.mxu0 0
    %203 = vmatmul.mubr.bf16.gmra.mrb[0].mxu0 %v112
    %v204 = vpop.f32.mrb[0].mxu0
    %v205 = vadd.f32 0.0, %v204
    %v206 = vpop.f32.mrb[0].mxu0
    %v207 = vpop.f32.mrb[0].mxu0
    %v208 = vadd.f32 0.0, %v207
    %v209 = vpop.f32.mrb[0].mxu0
    %210 = vdwg.mxu0
    %v211 = vtanh.pop %v149
    %v212 = vtanh.pop %v152
    %v213 = vtanh.pop %v157
    %v214 = vtanh.pop %v160
    %v215 = vtanh.pop %v165
    %v216 = vtanh.pop %v168
    %v217 = vtanh.pop %v173
    %v218 = vtanh.pop %v176
    %v219 = vtanh.pop %v181
    %v220 = vtanh.pop %v184
    %v221 = vtanh.pop %v189
    %v222 = vtanh.pop %v192
    %v223 = vtanh.pop %v197
    %v224 = vtanh.pop %v200
    %v225 = vtanh.pop %v205
    %v226 = vtanh.pop %v208
    %v227 = vpack.c.bf16 %v212, %v211
    %v228 = vpack.c.bf16 %v214, %v213
    %v229 = vpack.c.bf16 %v216, %v215
    %v230 = vpack.c.bf16 %v218, %v217
    %v231 = vpack.c.bf16 %v220, %v219
    %v232 = vpack.c.bf16 %v222, %v221
    %v233 = vpack.c.bf16 %v224, %v223
    %v234 = vpack.c.bf16 %v226, %v225
    %v235 = vld [vmem:[%s2] sm:$0xf]
    %v236 = vld [vmem:[%s2 + $0x4] sm:$0xf]
    %v237 = vld [vmem:[%s2 + $0x8] sm:$0xf]
    %v238 = vld [vmem:[%s2 + $0xc] sm:$0xf]
    %v239 = vld [vmem:[%s2 + $0x10] sm:$0xf]
    %v240 = vld [vmem:[%s2 + $0x14] sm:$0xf]
    %v241 = vld [vmem:[%s2 + $0x18] sm:$0xf]
    %v242 = vld [vmem:[%s2 + $0x1c] sm:$0xf]
    %v243 = vld [vmem:[%s2 + $0x20] sm:$0xf]
    %v244 = vld [vmem:[%s2 + $0x24] sm:$0xf]
    %v245 = vld [vmem:[%s2 + $0x28] sm:$0xf]
    %v246 = vld [vmem:[%s2 + $0x2c] sm:$0xf]
    %v247 = vld [vmem:[%s2 + $0x30] sm:$0xf]
    %v248 = vld [vmem:[%s2 + $0x34] sm:$0xf]
    %v249 = vld [vmem:[%s2 + $0x38] sm:$0xf]
    %v250 = vld [vmem:[%s2 + $0x3c] sm:$0xf]
    %v251 = vld [vmem:[%s3] sm:$0xff]
    %v252 = vld [vmem:[%s3 + $0x8] sm:$0xff]
    %v253 = vld [vmem:[%s3 + $0x10] sm:$0xff]
    %v254 = vld [vmem:[%s3 + $0x18] sm:$0xff]
    %v255 = vld [vmem:[%s3 + $0x20] sm:$0xff]
    %v256 = vld [vmem:[%s3 + $0x28] sm:$0xff]
    %v257 = vld [vmem:[%s3 + $0x30] sm:$0xff]
    %v258 = vld [vmem:[%s3 + $0x38] sm:$0xff]
    %v259 = vld [vmem:[%s3 + $0x40] sm:$0xff]
    %v260 = vld [vmem:[%s3 + $0x48] sm:$0xff]
    %v261 = vld [vmem:[%s3 + $0x50] sm:$0xff]
    %v262 = vld [vmem:[%s3 + $0x58] sm:$0xff]
    %v263 = vld [vmem:[%s3 + $0x60] sm:$0xff]
    %v264 = vld [vmem:[%s3 + $0x68] sm:$0xff]
    %v265 = vld [vmem:[%s3 + $0x70] sm:$0xff]
    %v266 = vld [vmem:[%s3 + $0x78] sm:$0xff]
    %268 = vset.pattern.permute.xlu0 0
    %269 = vperm.xlu0 %268, %v251
    %v270 = vpop.permute.xlu0 %269
    %273 = vset.pattern.permute.xlu0 0
    %274 = vperm.xlu0 %273, %v252
    %v275 = vpop.permute.xlu0 %274
    %278 = vset.pattern.permute.xlu0 0
    %279 = vperm.xlu0 %278, %v253
    %v280 = vpop.permute.xlu0 %279
    %283 = vset.pattern.permute.xlu0 0
    %284 = vperm.xlu0 %283, %v254
    %v285 = vpop.permute.xlu0 %284
    %288 = vset.pattern.permute.xlu0 0
    %289 = vperm.xlu0 %288, %v255
    %v290 = vpop.permute.xlu0 %289
    %293 = vset.pattern.permute.xlu0 0
    %294 = vperm.xlu0 %293, %v256
    %v295 = vpop.permute.xlu0 %294
    %298 = vset.pattern.permute.xlu0 0
    %299 = vperm.xlu0 %298, %v257
    %v300 = vpop.permute.xlu0 %299
    %303 = vset.pattern.permute.xlu0 0
    %304 = vperm.xlu0 %303, %v258
    %v305 = vpop.permute.xlu0 %304
    %308 = vset.pattern.permute.xlu0 0
    %309 = vperm.xlu0 %308, %v259
    %v310 = vpop.permute.xlu0 %309
    %313 = vset.pattern.permute.xlu0 0
    %314 = vperm.xlu0 %313, %v260
    %v315 = vpop.permute.xlu0 %314
    %318 = vset.pattern.permute.xlu0 0
    %319 = vperm.xlu0 %318, %v261
    %v320 = vpop.permute.xlu0 %319
    %323 = vset.pattern.permute.xlu0 0
    %324 = vperm.xlu0 %323, %v262
    %v325 = vpop.permute.xlu0 %324
    %328 = vset.pattern.permute.xlu0 0
    %329 = vperm.xlu0 %328, %v263
    %v330 = vpop.permute.xlu0 %329
    %333 = vset.pattern.permute.xlu0 0
    %334 = vperm.xlu0 %333, %v264
    %v335 = vpop.permute.xlu0 %334
    %338 = vset.pattern.permute.xlu0 0
    %339 = vperm.xlu0 %338, %v265
    %v340 = vpop.permute.xlu0 %339
    %343 = vset.pattern.permute.xlu0 0
    %344 = vperm.xlu0 %343, %v266
    %v345 = vpop.permute.xlu0 %344
    %v363 = vunpack.c.l.b16 %v235
    %v364 = vunpack.c.l.b16 %v236
    %v365 = vunpack.c.l.b16 %v237
    %v366 = vunpack.c.l.b16 %v238
    %v367 = vunpack.c.l.b16 %v239
    %v368 = vunpack.c.l.b16 %v240
    %v369 = vunpack.c.l.b16 %v241
    %v370 = vunpack.c.l.b16 %v242
    %v371 = vunpack.c.l.b16 %v243
    %v372 = vunpack.c.l.b16 %v244
    %v373 = vunpack.c.l.b16 %v245
    %v374 = vunpack.c.l.b16 %v246
    %v375 = vunpack.c.l.b16 %v247
    %v376 = vunpack.c.l.b16 %v248
    %v377 = vunpack.c.l.b16 %v249
    %v378 = vunpack.c.l.b16 %v250
    %v379 = vpack.c.b16 %v364, %v363
    %v380 = vpack.c.b16 %v366, %v365
    %v381 = vpack.c.b16 %v368, %v367
    %v382 = vpack.c.b16 %v370, %v369
    %v383 = vpack.c.b16 %v372, %v371
    %v384 = vpack.c.b16 %v374, %v373
    %v385 = vpack.c.b16 %v376, %v375
    %v386 = vpack.c.b16 %v378, %v377
    %395 = vmatprep.subr.bf16.mxu0 0
    %396 = vmatpush1.bf16.msra.mxu0 %v227
    %397 = vmatprep.subr.bf16.mxu0 0
    %398 = vmatpush1.bf16.msra.mxu0 %v228
    %399 = vmatprep.subr.bf16.mxu0 0
    %400 = vmatpush1.bf16.msra.mxu0 %v229
    %401 = vmatprep.subr.bf16.mxu0 0
    %402 = vmatpush1.bf16.msra.mxu0 %v230
    %403 = vmatprep.subr.bf16.mxu0 0
    %404 = vmatpush1.bf16.msra.mxu0 %v231
    %405 = vmatprep.subr.bf16.mxu0 0
    %406 = vmatpush1.bf16.msra.mxu0 %v232
    %407 = vmatprep.subr.bf16.mxu0 0
    %408 = vmatpush1.bf16.msra.mxu0 %v233
    %409 = vmatprep.subr.bf16.mxu0 0
    %410 = vmatpush1.bf16.msra.mxu0 %v234
    %411 = vmatprep.subr.bf16.mxu0 0
    %412 = vmatpush1.bf16.msra.mxu0 0
    %413 = vmatprep.subr.bf16.mxu0 0
    %414 = vmatpush1.bf16.msra.mxu0 0
    %415 = vmatprep.subr.bf16.mxu0 0
    %416 = vmatpush1.bf16.msra.mxu0 0
    %417 = vmatprep.subr.bf16.mxu0 0
    %418 = vmatpush1.bf16.msra.mxu0 0
    %419 = vmatprep.subr.bf16.mxu0 0
    %420 = vmatpush1.bf16.msra.mxu0 0
    %421 = vmatprep.subr.bf16.mxu0 0
    %422 = vmatpush1.bf16.msra.mxu0 0
    %423 = vmatprep.subr.bf16.mxu0 0
    %424 = vmatpush1.bf16.msra.mxu0 0
    %425 = vmatprep.subr.bf16.mxu0 0
    %426 = vmatpush1.bf16.msra.mxu0 0
    %427 = vmatprep.mubr.bf16.mxu0 0
    %428 = vmatmul.mubr.bf16.gmra.mrb[0].mxu0 %v379
    %v429 = vpop.f32.mrb[0].mxu0
    %v430 = vadd.f32 %v270, %v429
    %v431 = vpop.f32.mrb[0].mxu0
    %v432 = vpop.f32.mrb[0].mxu0
    %v433 = vadd.f32 %v275, %v432
    %v434 = vpop.f32.mrb[0].mxu0
    %435 = vmatprep.mubr.bf16.mxu0 0
    %436 = vmatmul.mubr.bf16.gmra.mrb[0].mxu0 %v380
    %v437 = vpop.f32.mrb[0].mxu0
    %v438 = vadd.f32 %v280, %v437
    %v439 = vpop.f32.mrb[0].mxu0
    %v440 = vpop.f32.mrb[0].mxu0
    %v441 = vadd.f32 %v285, %v440
    %v442 = vpop.f32.mrb[0].mxu0
    %443 = vmatprep.mubr.bf16.mxu0 0
    %444 = vmatmul.mubr.bf16.gmra.mrb[0].mxu0 %v381
    %v445 = vpop.f32.mrb[0].mxu0
    %v446 = vadd.f32 %v290, %v445
    %v447 = vpop.f32.mrb[0].mxu0
    %v448 = vpop.f32.mrb[0].mxu0
    %v449 = vadd.f32 %v295, %v448
    %v450 = vpop.f32.mrb[0].mxu0
    %451 = vmatprep.mubr.bf16.mxu0 0
    %452 = vmatmul.mubr.bf16.gmra.mrb[0].mxu0 %v382
    %v453 = vpop.f32.mrb[0].mxu0
    %v454 = vadd.f32 %v300, %v453
    %v455 = vpop.f32.mrb[0].mxu0
    %v456 = vpop.f32.mrb[0].mxu0
    %v457 = vadd.f32 %v305, %v456
    %v458 = vpop.f32.mrb[0].mxu0
    %459 = vmatprep.mubr.bf16.mxu0 0
    %460 = vmatmul.mubr.bf16.gmra.mrb[0].mxu0 %v383
    %v461 = vpop.f32.mrb[0].mxu0
    %v462 = vadd.f32 %v310, %v461
    %v463 = vpop.f32.mrb[0].mxu0
    %v464 = vpop.f32.mrb[0].mxu0
    %v465 = vadd.f32 %v315, %v464
    %v466 = vpop.f32.mrb[0].mxu0
    %467 = vmatprep.mubr.bf16.mxu0 0
    %468 = vmatmul.mubr.bf16.gmra.mrb[0].mxu0 %v384
    %v469 = vpop.f32.mrb[0].mxu0
    %v470 = vadd.f32 %v320, %v469
    %v471 = vpop.f32.mrb[0].mxu0
    %v472 = vpop.f32.mrb[0].mxu0
    %v473 = vadd.f32 %v325, %v472
    %v474 = vpop.f32.mrb[0].mxu0
    %475 = vmatprep.mubr.bf16.mxu0 0
    %476 = vmatmul.mubr.bf16.gmra.mrb[0].mxu0 %v385
    %v477 = vpop.f32.mrb[0].mxu0
    %v478 = vadd.f32 %v330, %v477
    %v479 = vpop.f32.mrb[0].mxu0
    %v480 = vpop.f32.mrb[0].mxu0
    %v481 = vadd.f32 %v335, %v480
    %v482 = vpop.f32.mrb[0].mxu0
    %483 = vmatprep.mubr.bf16.mxu0 0
    %484 = vmatmul.mubr.bf16.gmra.mrb[0].mxu0 %v386
    %v485 = vpop.f32.mrb[0].mxu0
    %v486 = vadd.f32 %v340, %v485
    %v487 = vpop.f32.mrb[0].mxu0
    %v488 = vpop.f32.mrb[0].mxu0
    %v489 = vadd.f32 %v345, %v488
    %v490 = vpop.f32.mrb[0].mxu0
    %491 = vdwg.mxu0
    %v492 = vtanh.pop %v430
    %v493 = vtanh.pop %v433
    %v494 = vtanh.pop %v438
    %v495 = vtanh.pop %v441
    %v496 = vtanh.pop %v446
    %v497 = vtanh.pop %v449
    %v498 = vtanh.pop %v454
    %v499 = vtanh.pop %v457
    %v500 = vtanh.pop %v462
    %v501 = vtanh.pop %v465
    %v502 = vtanh.pop %v470
    %v503 = vtanh.pop %v473
    %v504 = vtanh.pop %v478
    %v505 = vtanh.pop %v481
    %v506 = vtanh.pop %v486
    %v507 = vtanh.pop %v489
    %v508 = vpack.c.bf16 %v493, %v492
    %v509 = vpack.c.bf16 %v495, %v494
    %v510 = vpack.c.bf16 %v497, %v496
    %v511 = vpack.c.bf16 %v499, %v498
    %v512 = vpack.c.bf16 %v501, %v500
    %v513 = vpack.c.bf16 %v503, %v502
    %v514 = vpack.c.bf16 %v505, %v504
    %v515 = vpack.c.bf16 %v507, %v506
    %v516 = vld [vmem:[%s4] sm:$0x3]
    %v517 = vld [vmem:[%s5] sm:$0x7]
    %519 = vset.pattern.permute.xlu0 0
    %520 = vperm.xlu0 %519, %v517
    %v521 = vpop.permute.xlu0 %520
    %523 = vmatprep.subr.bf16.mxu0 0
    %524 = vmatpush1.bf16.msra.mxu0 %v508
    %525 = vmatprep.subr.bf16.mxu0 0
    %526 = vmatpush1.bf16.msra.mxu0 %v509
    %527 = vmatprep.subr.bf16.mxu0 0
    %528 = vmatpush1.bf16.msra.mxu0 %v510
    %529 = vmatprep.subr.bf16.mxu0 0
    %530 = vmatpush1.bf16.msra.mxu0 %v511
    %531 = vmatprep.subr.bf16.mxu0 0
    %532 = vmatpush1.bf16.msra.mxu0 %v512
    %533 = vmatprep.subr.bf16.mxu0 0
    %534 = vmatpush1.bf16.msra.mxu0 %v513
    %535 = vmatprep.subr.bf16.mxu0 0
    %536 = vmatpush1.bf16.msra.mxu0 %v514
    %537 = vmatprep.subr.bf16.mxu0 0
    %538 = vmatpush1.bf16.msra.mxu0 %v515
    %539 = vmatprep.subr.bf16.mxu0 0
    %540 = vmatpush1.bf16.msra.mxu0 0
    %541 = vmatprep.subr.bf16.mxu0 0
    %542 = vmatpush1.bf16.msra.mxu0 0
    %543 = vmatprep.subr.bf16.mxu0 0
    %544 = vmatpush1.bf16.msra.mxu0 0
    %545 = vmatprep.subr.bf16.mxu0 0
    %546 = vmatpush1.bf16.msra.mxu0 0
    %547 = vmatprep.subr.bf16.mxu0 0
    %548 = vmatpush1.bf16.msra.mxu0 0
    %549 = vmatprep.subr.bf16.mxu0 0
    %550 = vmatpush1.bf16.msra.mxu0 0
    %551 = vmatprep.subr.bf16.mxu0 0
    %552 = vmatpush1.bf16.msra.mxu0 0
    %553 = vmatprep.subr.bf16.mxu0 0
    %554 = vmatpush1.bf16.msra.mxu0 0
    %555 = vmatprep.mubr.bf16.mxu0 0
    %556 = vmatmul.mubr.bf16.gmra.mrb[0].mxu0 %v516
    %v557 = vpop.f32.mrb[0].mxu0
    %v558 = vadd.f32 %v521, %v557
    %v559 = vpop.f32.mrb[0].mxu0
    %v560 = vpop.f32.mrb[0].mxu0
    %v561 = vpop.f32.mrb[0].mxu0
    %562 = vdwg.mxu0
    %v563 = vmul.f32 %v558, %v558
    %vm564 = vcmask 59392
    %v565 = vsel %vm564, %v563, 0.0
    %v566 = vrot.slane %v565, 4
    %v567 = vadd.f32 %v565, %v566
    %v568 = vrot.slane %v567, 2
    %v569 = vadd.f32 %v567, %v568
    %v570 = vrot.slane %v569, 1
    %v571 = vadd.f32 %v569, %v570
    %v572 = vmul.f32 %v571, 0.5
    %vm573 = vcmask 57344
    %574 = vst.msk [vmem:[#allocation2] sm:$0x1] %vm573, %v572
    // Predicated region
    $region26: #{residual_net_forward.1} parent=1 // pred_check
      _
    $region27: #{residual_net_forward.1} parent=1 // pred_check_branch
      %576 = sbr.rel (0) target = $region29
    $region28: #{residual_net_forward.1} parent=1 // pred_region
      %s578 = ssub.s32 16, 16
      %579 = vsyncadd [#allocation3], %s578
      %s581 = sshll.u32 [#allocation2], 4
      %s582 = int_to_ptr.vmem [resolvable:$true] %s581
      %584 = dma.vmem_to_hbm [thread:$0]  %s582, 16, %s6, [#allocation3]
    $region29: #{residual_net_forward.1} parent=1 // pred_fallthru
      _
    // Predicated region
    $region30: #{residual_net_forward.1} parent=1 // pred_check
      _
    $region31: #{residual_net_forward.1} parent=1 // pred_check_branch
      %586 = sbr.rel (0) target = $region33
    $region32: #{residual_net_forward.1} parent=1 // pred_region
      %587 = dma.done [#allocation3], 16
    $region33: #{residual_net_forward.1} parent=1 // pred_fallthru
      _
    %588 = vsyncpa [#allocation3], 1

</llo_original>
